<compile_context>
chip_gen: v7x
topology: tpu7x:2x2x1
jax: 0.10.0
libtpu: 0.0.40
codegen_flags: <defaults>
</compile_context>

<pallas_src>
import functools

import jax
import jax.numpy as jnp
from jax.experimental import pallas as pl
from jax.experimental.pallas import tpu as pltpu


def _round_up(x, m):
    return ((x + m - 1) // m) * m


def _cdiv(a, b):
    return -(-a // b)


# LayerNorm is strictly HBM-bound: ~1 MiB tiles already sit near the HBM
# roofline, so per-step tiles are sized against this budget rather than the
# physical VMEM capacity (which differs across v5e/v6e/v7x).
_TILE_F32_BYTES = 1 * 1024 * 1024
# Aim for this many grid steps (>= 4 per TensorCore on v7x megacore) ...
_TARGET_STEPS = 8
# ... but never shrink a step below this much data (per-step overhead
# ~0.35us would dominate).
_MIN_STEP_BYTES = 16 * 1024


def _pick_tile(extent, granule, f32_bytes_per_unit, target_steps=_TARGET_STEPS):
    """Tile size along one grid axis.

    Largest multiple of `granule` (or the full `extent`) whose f32 working
    set fits the per-step budget, then split further so the grid has about
    `target_steps` steps, as long as each step keeps a useful amount of data.
    """
    if extent <= 0:
        return 1
    unit = max(int(f32_bytes_per_unit), 1)
    tile = max(1, _TILE_F32_BYTES // unit)
    tile = max(granule, (tile // granule) * granule)
    tile = min(tile, extent)
    if _cdiv(extent, tile) < target_steps:
        want = _round_up(max(1, _cdiv(extent, target_steps)), granule)
        floor = _round_up(max(1, _cdiv(_MIN_STEP_BYTES, unit)), granule)
        smaller = max(want, floor)
        if smaller < tile:
            tile = smaller
    return min(tile, extent)


def _vmem_limit(tile_elems, io_itemsize, resident_bytes):
    """Scoped-VMEM request from the actual working set: double-buffered input
    and output tiles in x.dtype plus ~4 full-tile f32 temporaries from the
    upcast/normalize path, plus resident operands, times a 2x margin."""
    ws = tile_elems * (4 * int(io_itemsize) + 4 * 4) + 2 * resident_bytes
    return int(min(max(2 * ws, 16 * 1024 * 1024), 48 * 1024 * 1024))


# ---------------------------------------------------------------------------
# Kernels
# ---------------------------------------------------------------------------

def _ln_rows_kernel(x_ref, w_ref, b_ref, o_ref, *, eps):
    """channels_last, C on lanes: x_ref (tile_rows, C); normalize each row."""
    w = w_ref[...].astype(jnp.float32)            # (1, C) resident, cast once
    b = b_ref[...].astype(jnp.float32)
    x = x_ref[...].astype(jnp.float32)
    mu = jnp.mean(x, axis=-1, keepdims=True)
    xc = x - mu
    var = jnp.mean(xc * xc, axis=-1, keepdims=True)
    o_ref[...] = (xc * jax.lax.rsqrt(var + eps) * w + b).astype(o_ref.dtype)


def _ln_rows_packed_kernel(x_ref, w_ref, b_ref, o_ref, *, eps, c):
    """channels_last, small power-of-two C, G = 128//C rows per packed row.

    x_ref is (tile, 128): lane l holds column (l % C) of original row
    (row_base + l // C).  Per-row sums use a log2(C) roll+add butterfly on
    the lane axis, keeping every load/store fully lane-dense.
    """
    x = x_ref[...].astype(jnp.float32)            # (tile, 128)
    w = w_ref[...].astype(jnp.float32)            # (1, 128)
    b = b_ref[...].astype(jnp.float32)
    lanes = x.shape[-1]
    lane = jax.lax.broadcasted_iota(jnp.int32, (1, lanes), 1)

    # For each butterfly distance d, find which roll direction delivers the
    # XOR-partner lane (robust to the roll shift convention).  Masks depend
    # only on lane indices and are shared by both reductions.
    steps = []
    d = 1
    while d < c:
        probe = pltpu.roll(lane, d, axis=1)
        steps.append((d, probe == (lane ^ d)))
        d *= 2

    def grouped_sum(v):
        s = v
        for dist, take_fwd in steps:
            fwd = pltpu.roll(s, dist, axis=1)
            bwd = pltpu.roll(s, lanes - dist, axis=1)
            s = s + jnp.where(take_fwd, fwd, bwd)
        return s

    inv_c = 1.0 / c
    mu = grouped_sum(x) * inv_c
    xc = x - mu
    var = grouped_sum(xc * xc) * inv_c
    o_ref[...] = (xc * jax.lax.rsqrt(var + eps) * w + b).astype(o_ref.dtype)


def _ln_channels_kernel(x_ref, w_ref, b_ref, o_ref, *, eps):
    """channels_first: x_ref (tile_b, C, tile_hw); normalize over C per pixel."""
    w = w_ref[...].astype(jnp.float32)            # (1, C, 1) resident
    b = b_ref[...].astype(jnp.float32)
    x = x_ref[...].astype(jnp.float32)
    mu = jnp.mean(x, axis=1, keepdims=True)       # (tile_b, 1, tile_hw)
    xc = x - mu
    var = jnp.mean(xc * xc, axis=1, keepdims=True)
    o_ref[...] = (xc * jax.lax.rsqrt(var + eps) * w + b).astype(o_ref.dtype)


# ---------------------------------------------------------------------------
# Wrappers
# ---------------------------------------------------------------------------

def _pack_factor(n_rows, c):
    """Rows packed per 128-lane row for the small-C channels_last path."""
    if c >= 128 or c < 1:
        return 1
    if c & (c - 1):                 # butterfly reduce needs a power-of-two C
        return 1
    g = 128 // c
    if n_rows % g != 0:             # the packing reshape must stay free
        return 1
    return g


def _layernorm_channels_last(x, weight, bias, eps):
    c = x.shape[-1]
    lead = x.shape[:-1]
    n = 1
    for d in lead:
        n *= d
    x2d = x.reshape(n, c)                          # free, C stays contiguous
    io_itemsize = x.dtype.itemsize

    g = _pack_factor(n, c)
    if g > 1:
        # ---- packed lane-dense path (small power-of-two C) ----------------
        lanes = g * c                               # == 128
        rows = n // g
        xp = x2d.reshape(rows, lanes)               # free reshape
        wp = jnp.tile(weight.reshape(1, c), (1, g))  # lane l <-> weight[l % C]
        bp = jnp.tile(bias.reshape(1, c), (1, g))

        tile_rows = _pick_tile(rows, 8, lanes * 4)
        grid = (_cdiv(rows, tile_rows),)
        out = pl.pallas_call(
            functools.partial(_ln_rows_packed_kernel, eps=eps, c=c),
            out_shape=jax.ShapeDtypeStruct((rows, lanes), x.dtype),
            grid_spec=pltpu.PrefetchScalarGridSpec(
                num_scalar_prefetch=0,
                grid=grid,
                in_specs=[
                    pl.BlockSpec((tile_rows, lanes), lambda i: (i, 0)),
                    pl.BlockSpec((1, lanes), lambda i: (0, 0)),
                    pl.BlockSpec((1, lanes), lambda i: (0, 0)),
                ],
                out_specs=pl.BlockSpec((tile_rows, lanes), lambda i: (i, 0)),
            ),
            compiler_params=pltpu.CompilerParams(
                dimension_semantics=("parallel",),
                vmem_limit_bytes=_vmem_limit(
                    tile_rows * lanes, io_itemsize, 2 * lanes * 4),
            ),
        )(xp, wp, bp)
        return out.reshape(*lead, c)

    # ---- fallback: C on lanes (C >= 128, or shapes that cannot pack) ------
    lanes_pad = _round_up(c, 128)
    tile_rows = _pick_tile(n, 8, lanes_pad * 4)
    grid = (_cdiv(n, tile_rows),)
    out = pl.pallas_call(
        functools.partial(_ln_rows_kernel, eps=eps),
        out_shape=jax.ShapeDtypeStruct((n, c), x.dtype),
        grid_spec=pltpu.PrefetchScalarGridSpec(
            num_scalar_prefetch=0,
            grid=grid,
            in_specs=[
                pl.BlockSpec((tile_rows, c), lambda i: (i, 0)),
                pl.BlockSpec((1, c), lambda i: (0, 0)),
                pl.BlockSpec((1, c), lambda i: (0, 0)),
            ],
            out_specs=pl.BlockSpec((tile_rows, c), lambda i: (i, 0)),
        ),
        compiler_params=pltpu.CompilerParams(
            dimension_semantics=("parallel",),
            vmem_limit_bytes=_vmem_limit(
                tile_rows * lanes_pad, io_itemsize, 2 * lanes_pad * 4),
        ),
    )(x2d, weight.reshape(1, c), bias.reshape(1, c))
    return out.reshape(*lead, c)


def _layernorm_channels_first(x, weight, bias, eps):
    bsz, c, h, w = x.shape
    hw = h * w
    x3d = x.reshape(bsz, c, hw)                     # free reshape, stays NCHW
    io_itemsize = x.dtype.itemsize
    c_sub = max(_round_up(c, 8), 8)

    if hw >= 128:
        # H*W on lanes (dense); one image per step, lane tile sized by budget
        # and split so the batch axis x hw axis give enough grid steps.
        tile_b = 1
        target_hw = max(1, _cdiv(_TARGET_STEPS, bsz))
        tile_hw = _pick_tile(hw, 128, c_sub * 4, target_steps=target_hw)
    else:
        # Small feature maps: keep H*W whole on lanes and batch several
        # images per grid step to amortize per-step overhead.
        tile_hw = hw
        per_img = c_sub * _round_up(hw, 128) * 4
        tile_b = _pick_tile(bsz, 1, per_img)

    grid = (_cdiv(bsz, tile_b), _cdiv(hw, tile_hw))
    tile_elems = tile_b * c_sub * _round_up(tile_hw, 128)

    out = pl.pallas_call(
        functools.partial(_ln_channels_kernel, eps=eps),
        out_shape=jax.ShapeDtypeStruct((bsz, c, hw), x.dtype),
        grid_spec=pltpu.PrefetchScalarGridSpec(
            num_scalar_prefetch=0,
            grid=grid,
            in_specs=[
                pl.BlockSpec((tile_b, c, tile_hw), lambda i, j: (i, 0, j)),
                pl.BlockSpec((1, c, 1), lambda i, j: (0, 0, 0)),
                pl.BlockSpec((1, c, 1), lambda i, j: (0, 0, 0)),
            ],
            out_specs=pl.BlockSpec((tile_b, c, tile_hw), lambda i, j: (i, 0, j)),
        ),
        compiler_params=pltpu.CompilerParams(
            dimension_semantics=("parallel", "parallel"),
            vmem_limit_bytes=_vmem_limit(
                tile_elems, io_itemsize, 2 * c_sub * 128 * 4),
        ),
    )(x3d, weight.reshape(1, c, 1), bias.reshape(1, c, 1))
    return out.reshape(bsz, c, h, w)


def layer_norm(x, weight, bias, eps=1e-6, data_format="channels_last"):
    if data_format not in ("channels_last", "channels_first"):
        raise NotImplementedError
    if data_format == "channels_last":
        return _layernorm_channels_last(x, weight, bias, eps)
    return _layernorm_channels_first(x, weight, bias, eps)


# ---------------------------------------------------------------------------
# Pure-JAX references + self-test
# ---------------------------------------------------------------------------

def _reference_channels_first(x, weight, bias, eps):
    u = jnp.mean(x, axis=1, keepdims=True)
    s = jnp.mean((x - u) ** 2, axis=1, keepdims=True)
    xn = (x - u) / jnp.sqrt(s + eps)
    return weight[None, :, None, None] * xn + bias[None, :, None, None]


def _reference_channels_last(x, weight, bias, eps):
    u = jnp.mean(x, axis=-1, keepdims=True)
    s = jnp.mean((x - u) ** 2, axis=-1, keepdims=True)
    xn = (x - u) / jnp.sqrt(s + eps)
    return xn * weight + bias


if __name__ == "__main__":
    key = jax.random.PRNGKey(0)
    ks = jax.random.split(key, 10)
    eps = 1e-6

    def make_params(c, kw, kb):
        w = jnp.ones((c,), jnp.float32) + 0.1 * jax.random.normal(kw, (c,), jnp.float32)
        b = jnp.zeros((c,), jnp.float32) + 0.1 * jax.random.normal(kb, (c,), jnp.float32)
        return w, b

    w4, b4 = make_params(4, ks[0], ks[1])
    w128, b128 = make_params(128, ks[2], ks[3])

    checks = []

    # channels_first, NCHW, H*W >= 128 (lane-dense H*W tiles).
    x = jax.random.normal(ks[4], (2, 4, 16, 16), jnp.float32)
    y = jax.block_until_ready(layer_norm(x, w4, b4, eps, "channels_first"))
    checks.append((y, _reference_channels_first(x, w4, b4, eps), x))

    # channels_first, small feature map (H*W < 128): batched-images path.
    x = jax.random.normal(ks[5], (4, 4, 7, 7), jnp.float32)
    y = jax.block_until_ready(layer_norm(x, w4, b4, eps, "channels_first"))
    checks.append((y, _reference_channels_first(x, w4, b4, eps), x))

    # channels_last, small power-of-two C -> packed lane-dense path.
    x = jax.random.normal(ks[6], (2, 16, 16, 4), jnp.float32)
    y = jax.block_until_ready(layer_norm(x, w4, b4, eps, "channels_last"))
    checks.append((y, _reference_channels_last(x, w4, b4, eps), x))

    # channels_last, ragged row count (63 rows) -> C-on-lanes fallback path.
    x = jax.random.normal(ks[7], (1, 7, 9, 4), jnp.float32)
    y = jax.block_until_ready(layer_norm(x, w4, b4, eps, "channels_last"))
    checks.append((y, _reference_channels_last(x, w4, b4, eps), x))

    # channels_last, C = 128 -> standard lane path (no packing needed).
    x = jax.random.normal(ks[8], (2, 4, 4, 128), jnp.float32)
    y = jax.block_until_ready(layer_norm(x, w128, b128, eps, "channels_last"))
    checks.append((y, _reference_channels_last(x, w128, b128, eps), x))

    for y, ref, x in checks:
        assert y.shape == x.shape and y.dtype == x.dtype
        assert jnp.allclose(y, ref, atol=1e-5, rtol=1e-5)

    print("KERNEL_OK")
</pallas_src>

<mosaic_0001>
module attributes {stable_mosaic.version = 11 : i64} {
  func.func @_ln_channels_kernel(%arg0: i32, %arg1: i32, %arg2: memref<1x4x256xf32, #tpu.memory_space<vmem>>, %arg3: memref<1x4x1xf32, #tpu.memory_space<vmem>>, %arg4: memref<1x4x1xf32, #tpu.memory_space<vmem>>, %arg5: memref<1x4x256xf32, #tpu.memory_space<vmem>>) attributes {dimension_semantics = [#tpu.dimension_semantics<parallel>, #tpu.dimension_semantics<parallel>], iteration_bounds = array<i64: 2, 1>, scalar_prefetch = 0 : i64, scratch_operands = 0 : i64, tpu.core_type = #tpu.core_type<tc>, window_params = [{transform_indices = @transform_0, window_bounds = array<i64: 1, 4, 256>}, {pipeline_mode = #tpu.pipeline_mode<synchronous>, transform_indices = @transform_1, window_bounds = array<i64: 1, 4, 1>}, {pipeline_mode = #tpu.pipeline_mode<synchronous>, transform_indices = @transform_2, window_bounds = array<i64: 1, 4, 1>}, {transform_indices = @transform_3, window_bounds = array<i64: 1, 4, 256>}]} {
    %c0 = arith.constant 0 : index
    %c0_0 = arith.constant 0 : index
    %c0_1 = arith.constant 0 : index
    %0 = vector.load %arg3[%c0, %c0_0, %c0_1] : memref<1x4x1xf32, #tpu.memory_space<vmem>>, vector<1x4x1xf32>
    %c0_2 = arith.constant 0 : index
    %c0_3 = arith.constant 0 : index
    %c0_4 = arith.constant 0 : index
    %1 = vector.load %arg4[%c0_2, %c0_3, %c0_4] : memref<1x4x1xf32, #tpu.memory_space<vmem>>, vector<1x4x1xf32>
    %c0_5 = arith.constant 0 : index
    %c0_6 = arith.constant 0 : index
    %c0_7 = arith.constant 0 : index
    %2 = vector.load %arg2[%c0_5, %c0_6, %c0_7] : memref<1x4x256xf32, #tpu.memory_space<vmem>>, vector<1x4x256xf32>
    %cst = arith.constant dense<0.000000e+00> : vector<1x256xf32>
    %3 = vector.multi_reduction <add>, %2, %cst [1] : vector<1x4x256xf32> to vector<1x256xf32>
    %4 = vector.shape_cast %3 : vector<1x256xf32> to vector<1x1x256xf32>
    %cst_8 = arith.constant 4.000000e+00 : f32
    %5 = vector.broadcast %cst_8 : f32 to vector<1x1x256xf32>
    %6 = arith.divf %4, %5 : vector<1x1x256xf32>
    %7 = vector.broadcast %6 : vector<1x1x256xf32> to vector<1x4x256xf32>
    %8 = arith.subf %2, %7 : vector<1x4x256xf32>
    %9 = arith.mulf %8, %8 : vector<1x4x256xf32>
    %cst_9 = arith.constant dense<0.000000e+00> : vector<1x256xf32>
    %10 = vector.multi_reduction <add>, %9, %cst_9 [1] : vector<1x4x256xf32> to vector<1x256xf32>
    %11 = vector.shape_cast %10 : vector<1x256xf32> to vector<1x1x256xf32>
    %cst_10 = arith.constant 4.000000e+00 : f32
    %12 = vector.broadcast %cst_10 : f32 to vector<1x1x256xf32>
    %13 = arith.divf %11, %12 : vector<1x1x256xf32>
    %cst_11 = arith.constant 9.99999997E-7 : f32
    %14 = vector.broadcast %cst_11 : f32 to vector<1x1x256xf32>
    %15 = arith.addf %13, %14 : vector<1x1x256xf32>
    %16 = math.rsqrt %15 : vector<1x1x256xf32>
    %17 = vector.broadcast %16 : vector<1x1x256xf32> to vector<1x4x256xf32>
    %18 = arith.mulf %8, %17 : vector<1x4x256xf32>
    %19 = vector.broadcast %0 : vector<1x4x1xf32> to vector<1x4x256xf32>
    %20 = arith.mulf %18, %19 : vector<1x4x256xf32>
    %21 = vector.broadcast %1 : vector<1x4x1xf32> to vector<1x4x256xf32>
    %22 = arith.addf %20, %21 : vector<1x4x256xf32>
    %c0_12 = arith.constant 0 : index
    %c0_13 = arith.constant 0 : index
    %c0_14 = arith.constant 0 : index
    %23 = vector.load %arg5[%c0_12, %c0_13, %c0_14] : memref<1x4x256xf32, #tpu.memory_space<vmem>>, vector<1x4x256xf32>
    tpu.vector_store %arg5[%c0_12, %c0_13, %c0_14], %22 {strides = array<i32>} : memref<1x4x256xf32, #tpu.memory_space<vmem>>, vector<1x4x256xf32>,
    return
  }
  func.func @transform_0(%arg0: i32, %arg1: i32) -> (i32, i32, i32) {
    %c0_i32 = arith.constant 0 : i32
    %c0_i32_0 = arith.constant 0 : i32
    return %arg0, %c0_i32, %arg1 : i32, i32, i32
  }
  func.func @transform_1(%arg0: i32, %arg1: i32) -> (i32, i32, i32) {
    %c0_i32 = arith.constant 0 : i32
    %c0_i32_0 = arith.constant 0 : i32
    %c0_i32_1 = arith.constant 0 : i32
    %c0_i32_2 = arith.constant 0 : i32
    return %c0_i32, %c0_i32_0, %c0_i32_1 : i32, i32, i32
  }
  func.func @transform_2(%arg0: i32, %arg1: i32) -> (i32, i32, i32) {
    %c0_i32 = arith.constant 0 : i32
    %c0_i32_0 = arith.constant 0 : i32
    %c0_i32_1 = arith.constant 0 : i32
    %c0_i32_2 = arith.constant 0 : i32
    return %c0_i32, %c0_i32_0, %c0_i32_1 : i32, i32, i32
  }
  func.func @transform_3(%arg0: i32, %arg1: i32) -> (i32, i32, i32) {
    %c0_i32 = arith.constant 0 : i32
    %c0_i32_0 = arith.constant 0 : i32
    return %arg0, %c0_i32, %arg1 : i32, i32, i32
  }
}

</mosaic_0001>

<llo_original>
// kernel: tpu_custom_call.1
$region0: #{tpu_custom_call.1}
  #allocation0 [shape = 'u32[]', space=smem, size = 0x4, offset = 0x4, fixed_abs, tag = 'smem constant byte address 0x4 - core index']
  #allocation1 [shape = 'u32[144,128]{1,0:T(1,128)}', space=vmem, size = 0x12000, scoped, tag = 'internal scratch']
  %s0 = inlined_call_operand.hbm [shape: f32[2,4,256], index: 0, kind: input, shape index: {}]
  %s1 = inlined_call_operand.vmem [shape: f32[1,4,1], index: 1, kind: input, shape index: {}]
  %s2 = inlined_call_operand.vmem [shape: f32[1,4,1], index: 2, kind: input, shape index: {}]
  %s3 = inlined_call_operand.hbm [shape: f32[2,4,256], index: 3, kind: output, shape index: {}]
  %s4 = sld [smem:[#allocation0]]
  $region49: #{tpu_custom_call.1} parent=0
    _
  %s6 = ssub.s32 1, %s4
  %s7 = scalar_select 0, %s6, %s4
  $region1: #{tpu_custom_call.1} parent=0
    #allocation2 [shape = 'u8[8192]{0}', space=vmem, size = 0x2000, scoped, tag = 'input window, operand 0']
    #allocation3 [shape = 's32[2]{0}', space=sflag, size = 0x8, scoped, tag = 'scoped memory for tpu_custom_call.1']
    #allocation4 [shape = 's32[2]{0}', space=sflag, size = 0x8, scoped, tag = 'scoped memory for tpu_custom_call.1']
    #allocation5 [shape = 'u8[8192]{0}', space=vmem, size = 0x2000, scoped, tag = 'output window, operand 0']
    %8 = vsyncpa [#allocation3], 0
    %s9 = scalar_lea.sflag [#allocation3], 1
    %10 = vsyncpa %s9, 0
    %11 = vsyncpa [#allocation4], 0
    %s12 = scalar_lea.sflag [#allocation4], 1
    %13 = vsyncpa %s12, 0
    loop: start=0, step=1, limit=4
    $region2: #{tpu_custom_call.1} parent=1 // loop_pre_header
      _
    $region3: #{tpu_custom_call.1} parent=1 // loop_header
      %s15 = sphi 0, %s19
      %p16 = scmp.ge.s32.totalorder %s15, 4
      %s22 = sphi 0, %s34
      %s23 = sphi 0, %s30
      %s24 = sphi 0, %s22
      %s25 = sphi 0, %s23
      %s26 = sphi 0, %s24
      %s27 = sphi 0, %s25
      %s39 = sphi 0, %s41
      %s42 = sphi 0, %s39
      %s43 = sphi 0, %s42
      %s59 = sphi 0, %s43
      %s63 = sphi 0, %s63
      %s65 = sphi 0, %s63
      %s66 = sphi 0, %s65
      %s80 = sphi 0, %s66
      %s84 = sphi 0, %s84
      %s86 = sphi 0, %s84
      %s87 = sphi 0, %s86
      %s101 = sphi 0, %s87
      %s109 = sphi 0, %s111
      %s112 = sphi 0, %s109
      %s113 = sphi 0, %s112
      %s129 = sphi 0, %s113
    $region4: #{tpu_custom_call.1} parent=1 // loop_header_branch
      %18 = sbr.rel (%p16) target = $region8
    $region5: #{tpu_custom_call.1} parent=1 // loop_body
      %s20 = ssub.s32 %s15, 1
      %s21 = ssub.s32 %s15, 2
      %s28 = sadd.s32 1, %s23
      %p29 = scmp.ge.s32.totalorder %s28, 1
      %s30 = scalar_select %p29, 0, %s28
      %s31 = sadd.s32 1, %s22
      %s32 = scalar_select %p29, %s31, %s22
      %p33 = scmp.ge.s32.totalorder %s32, 2
      %s34 = scalar_select %p33, 0, %s32
      %s35 = ssub.s32 %s22, %s34
      %s36 = ssub.s32 %s23, %s30
      %s37 = sor.u32 %s35, %s36
      %p38 = scmp.eq.s32.totalorder %s37, 0
      %s40 = sadd.s32 %s39, 1
      %s41 = scalar_select %p38, %s39, %s40
      %p44 = pneg %p38
      %p45 = scmp.eq.s32.totalorder %s15, 1
      %p46 = por %p44, %p45
      %p47 = scmp.ne.s32.totalorder %s39, %s42
      %p48 = scmp.eq.s32.totalorder %s15, 0
      %p49 = por %p47, %p48
      %p50 = scmp.ne.s32.totalorder %s39, %s42
      %p51 = scmp.eq.s32.totalorder %s20, 1
      %p52 = por %p50, %p51
      %p53 = scmp.ne.s32.totalorder %s42, %s43
      %p54 = scmp.eq.s32.totalorder %s20, 0
      %p55 = por %p53, %p54
      %p56 = scmp.ne.s32.totalorder %s42, %s43
      %p57 = scmp.eq.s32.totalorder %s21, 1
      %p58 = por %p56, %p57
      %p60 = scmp.ne.s32.totalorder %s43, %s59
      %p61 = scmp.eq.s32.totalorder %s21, 0
      %p62 = por %p60, %p61
      %s64 = sadd.s32 %s63, 1
      %p67 = scmp.eq.s32.totalorder %s15, 1
      %p68 = scmp.ne.s32.totalorder %s63, %s65
      %p69 = scmp.eq.s32.totalorder %s15, 0
      %p70 = por %p68, %p69
      %p71 = scmp.ne.s32.totalorder %s63, %s65
      %p72 = scmp.eq.s32.totalorder %s20, 1
      %p73 = por %p71, %p72
      %p74 = scmp.ne.s32.totalorder %s65, %s66
      %p75 = scmp.eq.s32.totalorder %s20, 0
      %p76 = por %p74, %p75
      %p77 = scmp.ne.s32.totalorder %s65, %s66
      %p78 = scmp.eq.s32.totalorder %s21, 1
      %p79 = por %p77, %p78
      %p81 = scmp.ne.s32.totalorder %s66, %s80
      %p82 = scmp.eq.s32.totalorder %s21, 0
      %p83 = por %p81, %p82
      %s85 = sadd.s32 %s84, 1
      %p88 = scmp.eq.s32.totalorder %s15, 1
      %p89 = scmp.ne.s32.totalorder %s84, %s86
      %p90 = scmp.eq.s32.totalorder %s15, 0
      %p91 = por %p89, %p90
      %p92 = scmp.ne.s32.totalorder %s84, %s86
      %p93 = scmp.eq.s32.totalorder %s20, 1
      %p94 = por %p92, %p93
      %p95 = scmp.ne.s32.totalorder %s86, %s87
      %p96 = scmp.eq.s32.totalorder %s20, 0
      %p97 = por %p95, %p96
      %p98 = scmp.ne.s32.totalorder %s86, %s87
      %p99 = scmp.eq.s32.totalorder %s21, 1
      %p100 = por %p98, %p99
      %p102 = scmp.ne.s32.totalorder %s87, %s101
      %p103 = scmp.eq.s32.totalorder %s21, 0
      %p104 = por %p102, %p103
      %s105 = ssub.s32 %s22, %s34
      %s106 = ssub.s32 %s23, %s30
      %s107 = sor.u32 %s105, %s106
      %p108 = scmp.eq.s32.totalorder %s107, 0
      %s110 = sadd.s32 %s109, 1
      %s111 = scalar_select %p108, %s109, %s110
      %p114 = pneg %p108
      %p115 = scmp.eq.s32.totalorder %s15, 1
      %p116 = por %p114, %p115
      %p117 = scmp.ne.s32.totalorder %s109, %s112
      %p118 = scmp.eq.s32.totalorder %s15, 0
      %p119 = por %p117, %p118
      %p120 = scmp.ne.s32.totalorder %s109, %s112
      %p121 = scmp.eq.s32.totalorder %s20, 1
      %p122 = por %p120, %p121
      %p123 = scmp.ne.s32.totalorder %s112, %s113
      %p124 = scmp.eq.s32.totalorder %s20, 0
      %p125 = por %p123, %p124
      %p126 = scmp.ne.s32.totalorder %s112, %s113
      %p127 = scmp.eq.s32.totalorder %s21, 1
      %p128 = por %p126, %p127
      %p130 = scmp.ne.s32.totalorder %s113, %s129
      %p131 = scmp.eq.s32.totalorder %s21, 0
      %p132 = por %p130, %p131
      %p133 = scmp.le.s32.totalorder 1, %s15
      %p134 = scmp.lt.s32.totalorder %s15, 3
      %p135 = pnand %p133, %p134
      %p136 = pneg %p135
      // Predicated region
      $region9: #{tpu_custom_call.1} parent=5 // pred_check
        _
      $region10: #{tpu_custom_call.1} parent=5 // pred_check_branch
        %138 = sbr.rel (%p135) target = $region12
      $region11: #{tpu_custom_call.1} parent=5 // pred_region
        %s139 = ssub.s32 %s15, 1
        // Predicated region
        $region13: #{tpu_custom_call.1} parent=11 // pred_check
          %p140 = pneg %p76
        $region14: #{tpu_custom_call.1} parent=11 // pred_check_branch
          %142 = sbr.rel (%p140) target = $region16
        $region15: #{tpu_custom_call.1} parent=11 // pred_region
          _
        $region16: #{tpu_custom_call.1} parent=11 // pred_fallthru
          _
        // Predicated region
        $region17: #{tpu_custom_call.1} parent=11 // pred_check
          %p143 = pneg %p97
        $region18: #{tpu_custom_call.1} parent=11 // pred_check_branch
          %145 = sbr.rel (%p143) target = $region20
        $region19: #{tpu_custom_call.1} parent=11 // pred_region
          _
        $region20: #{tpu_custom_call.1} parent=11 // pred_fallthru
          _
      $region12: #{tpu_custom_call.1} parent=5 // pred_fallthru
        _
      %p146 = scmp.lt.s32.totalorder %s15, 2
      // Predicated region
      $region21: #{tpu_custom_call.1} parent=5 // pred_check
        %p147 = pneg %p146
      $region22: #{tpu_custom_call.1} parent=5 // pred_check_branch
        %149 = sbr.rel (%p147) target = $region24
      $region23: #{tpu_custom_call.1} parent=5 // pred_region
        // Predicated region
        $region25: #{tpu_custom_call.1} parent=23 // pred_check
          %p150 = pneg %p49
        $region26: #{tpu_custom_call.1} parent=23 // pred_check_branch
          %152 = sbr.rel (%p150) target = $region28
        $region27: #{tpu_custom_call.1} parent=23 // pred_region
          %s153 = sand.u32 %s39, 1
          %s154 = scalar_lea.sflag [#allocation3], %s153
          %s155 = sand.u32 %s39, 1
          %s156 = smul.addr %s155, 8
          %s157 = scalar_lea.vmem [#allocation2], %s156
          %s158 = smul.u32 2, %s23
          %s160 = ssub.s32 128, 128
          %161 = vsyncadd %s154, %s160
          %s162 = smul.addr %s22, 2
          %s163 = sadd.s32 %s158, %s162
          %s164 = smul.addr %s163, 64
          %s165 = scalar_lea.hbm %s0, %s164
          %s167 = sshll.u32 %s157, 4
          %s168 = int_to_ptr.vmem [resolvable:$true] %s167
          %170 = dma.hbm_to_vmem [thread:$0]  %s165, 128, %s168, %s154
        $region28: #{tpu_custom_call.1} parent=23 // pred_fallthru
          _
      $region24: #{tpu_custom_call.1} parent=5 // pred_fallthru
        _
      %p171 = scmp.le.s32.totalorder 1, %s15
      %p172 = scmp.lt.s32.totalorder %s15, 3
      %p173 = pnand %p171, %p172
      %p174 = pneg %p173
      // Predicated region
      $region29: #{tpu_custom_call.1} parent=5 // pred_check
        _
      $region30: #{tpu_custom_call.1} parent=5 // pred_check_branch
        %176 = sbr.rel (%p173) target = $region32
      $region31: #{tpu_custom_call.1} parent=5 // pred_region
        %s177 = ssub.s32 %s15, 1
        %s178 = sand.u32 %s42, 1
        %s179 = scalar_lea.sflag [#allocation3], %s178
        %s180 = sand.u32 %s42, 1
        %s181 = smul.addr %s180, 8
        %s182 = scalar_lea.vmem [#allocation2], %s181
        // Predicated region
        $region33: #{tpu_custom_call.1} parent=31 // pred_check
          %p183 = pneg %p55
        $region34: #{tpu_custom_call.1} parent=31 // pred_check_branch
          %185 = sbr.rel (%p183) target = $region36
        $region35: #{tpu_custom_call.1} parent=31 // pred_region
          %186 = dma.done %s179, 128
        $region36: #{tpu_custom_call.1} parent=31 // pred_fallthru
          _
        %s187 = sand.u32 %s42, 1
        %s188 = scalar_lea.sflag [#allocation3], %s187
        %s189 = sand.u32 %s42, 1
        %s190 = smul.addr %s189, 8
        %s191 = scalar_lea.vmem [#allocation2], %s190
        %p192 = pneg %p55
        %p193 = pneg %p52
        %p194 = pneg %p76
        %p195 = pneg %p73
        %p196 = pneg %p97
        %p197 = pneg %p94
        %p198 = pneg %p125
        %p199 = pneg %p122
        %s200 = sand.u32 %s112, 1
        %s201 = scalar_lea.sflag [#allocation4], %s200
        %s202 = sand.u32 %s112, 1
        %s203 = smul.addr %s202, 8
        %s204 = scalar_lea.vmem [#allocation5], %s203
        %s205 = smul.u32 2, %s25
        %s206 = smul.u32 2, %s25
        %v207 = vld [vmem:[%s1] sm:$0xf]
        %v208 = vld [vmem:[%s2] sm:$0xf]
        %v209 = vld [vmem:[%s182] sm:$0xff]
        %v211 = vcombine.high %v209, %v209
        %vm213 = vcmask 1043456
        %v214 = vsel %vm213, %v209, 0.0
        %v215 = vrot.slane %v214, 4
        %v216 = vadd.f32 %v214, %v215
        %v217 = vrot.slane %v216, 2
        %v218 = vadd.f32 %v216, %v217
        %v219 = vrot.slane %v218, 1
        %v220 = vadd.f32 %v218, %v219
        %v221 = vsel %vm213, %v211, 0.0
        %v222 = vrot.slane %v221, 4
        %v223 = vadd.f32 %v221, %v222
        %v224 = vrot.slane %v223, 2
        %v225 = vadd.f32 %v223, %v224
        %v226 = vrot.slane %v225, 1
        %v227 = vadd.f32 %v225, %v226
        %v228 = vrcp.pop 4.0
        %v229 = vmul.f32 %v220, %v228
        %v230 = vmul.f32 %v227, %v228
        %v233 = vcombine.low %v229, %v230
        %v235 = vsub.f32 %v209, %v233
        %v236 = vmul.f32 %v235, %v235
        %v238 = vcombine.high %v236, %v236
        %v240 = vsel %vm213, %v236, 0.0
        %v241 = vrot.slane %v240, 4
        %v242 = vadd.f32 %v240, %v241
        %v243 = vrot.slane %v242, 2
        %v244 = vadd.f32 %v242, %v243
        %v245 = vrot.slane %v244, 1
        %v246 = vadd.f32 %v244, %v245
        %v247 = vsel %vm213, %v238, 0.0
        %v248 = vrot.slane %v247, 4
        %v249 = vadd.f32 %v247, %v248
        %v250 = vrot.slane %v249, 2
        %v251 = vadd.f32 %v249, %v250
        %v252 = vrot.slane %v251, 1
        %v253 = vadd.f32 %v251, %v252
        %v254 = vmul.f32 %v246, %v228
        %v255 = vmul.f32 %v253, %v228
        %v256 = vadd.f32 %v254, 1e-06
        %v257 = vadd.f32 %v255, 1e-06
        %v258 = vrsqrt.pop %v256
        %v259 = vrsqrt.pop %v257
        %v262 = vcombine.low %v258, %v259
        %v264 = vmul.f32 %v235, %v262
        %266 = vset.pattern.permute.xlu0 0
        %267 = vperm.xlu0 %266, %v207
        %v268 = vpop.permute.xlu0 %267
        %v270 = vunpack.c.l.s4 839922192
        %v271 = vunpack.c.0.s8 %v270
        %v272 = vlaneseq
        %v273 = vshrl.u32 %v272, 7
        %v274 = vsub.s32 %v271, %v273
        %v275 = vrot.slane %v268, %v274
        %v277 = vmul.f32 %v264, %v275
        %279 = vset.pattern.permute.xlu0 0
        %280 = vperm.xlu0 %279, %v208
        %v281 = vpop.permute.xlu0 %280
        %v283 = vunpack.c.l.s4 839922192
        %v284 = vunpack.c.0.s8 %v283
        %v285 = vlaneseq
        %v286 = vshrl.u32 %v285, 7
        %v287 = vsub.s32 %v284, %v286
        %v288 = vrot.slane %v281, %v287
        %v290 = vadd.f32 %v277, %v288
        %291 = vst [vmem:[%s204] sm:$0xff] %v290
        %s292 = sand.u32 %s112, 1
        %s293 = scalar_lea.sflag [#allocation4], %s292
        %s294 = sand.u32 %s112, 1
        %s295 = smul.addr %s294, 8
        %s296 = scalar_lea.vmem [#allocation5], %s295
        // Predicated region
        $region37: #{tpu_custom_call.1} parent=31 // pred_check
          %p297 = pneg %p122
        $region38: #{tpu_custom_call.1} parent=31 // pred_check_branch
          %299 = sbr.rel (%p297) target = $region40
        $region39: #{tpu_custom_call.1} parent=31 // pred_region
          %s300 = smul.u32 2, %s25
          %s302 = ssub.s32 128, 128
          %303 = vsyncadd %s293, %s302
          %s304 = smul.addr %s24, 2
          %s305 = sadd.s32 %s300, %s304
          %s306 = smul.addr %s305, 64
          %s307 = scalar_lea.hbm %s3, %s306
          %s309 = sshll.u32 %s296, 4
          %s310 = int_to_ptr.vmem [resolvable:$true] %s309
          %312 = dma.vmem_to_hbm [thread:$0]  %s310, 128, %s307, %s293
        $region40: #{tpu_custom_call.1} parent=31 // pred_fallthru
          _
      $region32: #{tpu_custom_call.1} parent=5 // pred_fallthru
        _
      %p313 = scmp.le.s32.totalorder 2, %s15
      // Predicated region
      $region41: #{tpu_custom_call.1} parent=5 // pred_check
        %p314 = pneg %p313
      $region42: #{tpu_custom_call.1} parent=5 // pred_check_branch
        %316 = sbr.rel (%p314) target = $region44
      $region43: #{tpu_custom_call.1} parent=5 // pred_region
        %s317 = ssub.s32 %s15, 2
        // Predicated region
        $region45: #{tpu_custom_call.1} parent=43 // pred_check
          %p318 = pneg %p128
        $region46: #{tpu_custom_call.1} parent=43 // pred_check_branch
          %320 = sbr.rel (%p318) target = $region48
        $region47: #{tpu_custom_call.1} parent=43 // pred_region
          %s321 = sand.u32 %s113, 1
          %s322 = scalar_lea.sflag [#allocation4], %s321
          %s323 = sand.u32 %s113, 1
          %s324 = smul.addr %s323, 8
          %s325 = scalar_lea.vmem [#allocation5], %s324
          %326 = dma.done %s322, 128
        $region48: #{tpu_custom_call.1} parent=43 // pred_fallthru
          _
      $region44: #{tpu_custom_call.1} parent=5 // pred_fallthru
        _
    $region6: #{tpu_custom_call.1} parent=1 // loop_footer
      %s19 = sadd.s32 1, %s15
    $region7: #{tpu_custom_call.1} parent=1 // loop_footer_branch
      %14 = sbr.rel target = $region3
    $region8: #{tpu_custom_call.1} parent=1 // loop_exit
      _
    %327 = vsyncpa [#allocation3], 1
    %s328 = scalar_lea.sflag [#allocation3], 1
    %329 = vsyncpa %s328, 1
    %330 = vsyncpa [#allocation4], 1
    %s331 = scalar_lea.sflag [#allocation4], 1
    %332 = vsyncpa %s331, 1

</llo_original>
